<compile_context>
chip_gen: v7x
topology: tpu7x:2x2x1
jax: 0.10.0
libtpu: 0.0.40
codegen_flags: <defaults>
</compile_context>

<pallas_src>
import jax
import jax.numpy as jnp
from jax.experimental import pallas as pl
from jax.experimental.pallas import tpu as pltpu


def _me_scale_kernel(x_ref, s_ref, *o_refs):
    """Broadcast-multiply one (nb, C, T) tile of x by P per-channel scales.

    x_ref : (nb, C, T)  native NCHW layout: channels on sublanes, HW on lanes
    s_ref : (nb, C, P)  per-part channel scales, already in x's dtype
    o_refs: P refs, each (nb, C, T) — one output slab per part
    """
    x = x_ref[...]                      # read the input tile once
    s = s_ref[...]                      # (nb, C, P), same dtype as x
    for p, o_ref in enumerate(o_refs):  # static, small trip count
        o_ref[...] = x * s[:, :, p:p + 1]     # (nb, C, 1) lane-broadcast


def _cdiv(a, b):
    return (a + b - 1) // b


def _round_up(x, m):
    return _cdiv(x, m) * m


def _round_down(x, m):
    return (x // m) * m


# Block-shape heuristics (byte-based, per the perf review).
_TARGET_SLAB = 2 << 20     # ~2 MiB of x per grid step (1-4 MiB sweet spot)
_MAX_FULL_SLAB = 4 << 20   # full-HW-extent fallback only if slab stays <= 4 MiB
_MIN_STEPS = 4             # give both v7x TensorCores several grid steps


def _choose_blocks(B, C, HW, itemsize):
    """Pick (nb, tile): batch rows per block and lane tile along the HW axis."""
    row_bytes = C * itemsize
    cap = max(128, _round_down(_TARGET_SLAB // row_bytes, 128))

    if HW % 128 == 0:
        # Exact lane-dense tiling: largest 128-multiple divisor of HW <= cap.
        tile = 128
        t = min(cap, HW)
        while t >= 128:
            if HW % t == 0:
                tile = t
                break
            t -= 128
    elif HW < 128 or C * HW * itemsize <= _MAX_FULL_SLAB:
        # Full HW extent: always a legal block; batch axis supplies grid steps.
        tile = HW
    else:
        # 128-multiple tile (<= HW) with a masked tail block on the last step.
        tile = min(cap, _round_down(HW, 128))

    # Batch blocking: pack several batch rows per step when one row is small.
    slab = C * tile * itemsize
    divs = [d for d in range(1, B + 1) if B % d == 0]
    nb = max([d for d in divs if d * slab <= _TARGET_SLAB] or [1])

    # Megacore: keep a few grid steps where shapes permit (shrink nb only).
    while nb > 1 and (B // nb) * _cdiv(HW, tile) < _MIN_STEPS:
        nb = max(d for d in divs if d < nb)

    return nb, tile


@jax.jit
def me_layer_pallas(x_nchw, w1, b1, w2, b2):
    """x_nchw: (B, C, H, W); stacked per-part weights (math layout, in x out):
         w1: (P, C, Cr), b1: (P, 1, Cr), w2: (P, Cr, C), b2: (P, 1, C)
       Returns a tuple of P arrays, each (B, C, H, W) — the list MELayer returns."""
    B, C, H, W = x_nchw.shape
    P = w1.shape[0]
    HW = H * W

    # Free reshape to native (B, C, HW) — no transposes anywhere.
    x = x_nchw.reshape(B, C, HW)

    # ---- SE MLP hoisted to XLA (tiny): s[b, c, p] ------------------------
    f32 = jnp.float32
    hp = jax.lax.Precision.HIGHEST
    y = jnp.mean(x.astype(f32), axis=-1)                               # (B, C)
    h = jnp.einsum('bc,pcr->bpr', y, w1.astype(f32), precision=hp)
    h = jnp.maximum(h + b1[:, 0].astype(f32)[None], 0.0)               # (B, P, Cr)
    s = jnp.einsum('bpr,prc->bcp', h, w2.astype(f32), precision=hp)
    s = jax.nn.sigmoid(s + b2[:, 0].astype(f32).T[None])               # (B, C, P)
    s = s.astype(x_nchw.dtype)   # hoist the per-part cast out of the kernel

    # ---- Pallas: pure bandwidth-bound broadcast multiply -----------------
    itemsize = jnp.dtype(x_nchw.dtype).itemsize
    nb, tile = _choose_blocks(B, C, HW, itemsize)
    grid = (B // nb, _cdiv(HW, tile))

    # VMEM budget from the actual double-buffered footprint (+ margin),
    # rather than a fixed fraction of physical VMEM (v7x only has 64 MiB).
    c_pad = _round_up(C, 8)
    x_slab = nb * c_pad * _round_up(tile, 128) * itemsize
    s_slab = nb * c_pad * _round_up(P, 128) * itemsize
    vmem_needed = 2 * ((1 + P) * x_slab + s_slab)
    vmem_limit = int(min(max(vmem_needed + (8 << 20), 16 << 20), 48 << 20))

    cost = pl.CostEstimate(
        flops=P * B * C * HW,
        transcendentals=0,
        bytes_accessed=(1 + P) * B * C * HW * itemsize + B * C * P * itemsize,
    )

    outs = pl.pallas_call(
        _me_scale_kernel,
        out_shape=tuple(jax.ShapeDtypeStruct((B, C, HW), x_nchw.dtype)
                        for _ in range(P)),
        grid_spec=pltpu.PrefetchScalarGridSpec(
            num_scalar_prefetch=0,
            grid=grid,
            in_specs=[
                # x block: read from HBM exactly once per step, shared by all parts.
                pl.BlockSpec((nb, C, tile), lambda b, t: (b, 0, t)),
                # All P scale columns for this batch block; constant across t.
                pl.BlockSpec((nb, C, P), lambda b, t: (b, 0, 0)),
            ],
            out_specs=[pl.BlockSpec((nb, C, tile), lambda b, t: (b, 0, t))
                       for _ in range(P)],
        ),
        compiler_params=pltpu.CompilerParams(
            dimension_semantics=("parallel", "parallel"),
            vmem_limit_bytes=vmem_limit,
        ),
        cost_estimate=cost,
    )(x, s)

    # Free reshapes back to NCHW.
    return tuple(o.reshape(B, C, H, W) for o in outs)


def me_layer_reference(x_nchw, w1, b1, w2, b2):
    """Pure-JAX reference mirroring the PyTorch forward (returns list of parts)."""
    hp = jax.lax.Precision.HIGHEST
    y = jnp.mean(x_nchw.astype(jnp.float32), axis=(2, 3))              # (B, C)
    outs = []
    for p in range(w1.shape[0]):
        h = jnp.maximum(jnp.dot(y, w1[p].astype(jnp.float32), precision=hp)
                        + b1[p], 0.0)                                   # (B, Cr)
        s = jax.nn.sigmoid(jnp.dot(h, w2[p].astype(jnp.float32), precision=hp)
                           + b2[p])                                     # (B, C)
        outs.append(x_nchw * s[:, :, None, None].astype(x_nchw.dtype))
    return outs


if __name__ == "__main__":
    # Small shapes consistent with the module: channels divisible by the
    # reduction factor (16), so C=64 -> hidden Cr=4; nparts=2.
    B, C, H, W = 2, 64, 16, 16
    reduction = 16
    nparts = 2
    Cr = C // reduction

    key = jax.random.PRNGKey(0)
    kx, k1, k2, k3, k4 = jax.random.split(key, 5)

    x = jax.random.normal(kx, (B, C, H, W), dtype=jnp.float32)

    # Deterministic synthetic parameters (nn.Linear-style fan-in scaling),
    # stacked over parts; math layout (in, out) so the MLP is y @ W.
    w1 = jax.random.uniform(k1, (nparts, C, Cr), jnp.float32, -1.0, 1.0) / jnp.sqrt(C)
    b1 = jax.random.uniform(k2, (nparts, 1, Cr), jnp.float32, -1.0, 1.0) / jnp.sqrt(C)
    w2 = jax.random.uniform(k3, (nparts, Cr, C), jnp.float32, -1.0, 1.0) / jnp.sqrt(Cr)
    b2 = jax.random.uniform(k4, (nparts, 1, C), jnp.float32, -1.0, 1.0) / jnp.sqrt(Cr)

    outs = me_layer_pallas(x, w1, b1, w2, b2)
    outs = jax.block_until_ready(outs)

    refs = me_layer_reference(x, w1, b1, w2, b2)
    assert len(outs) == nparts
    for p in range(nparts):
        assert outs[p].shape == (B, C, H, W)
        assert jnp.allclose(outs[p], refs[p], atol=1e-5, rtol=1e-5), \
            f"mismatch vs reference on part {p}"

    print("KERNEL_OK")
</pallas_src>

<mosaic_0001>
module attributes {stable_mosaic.version = 11 : i64} {
  func.func @_me_scale_kernel(%arg0: i32, %arg1: i32, %arg2: memref<1x64x256xf32, #tpu.memory_space<vmem>>, %arg3: memref<1x64x2xf32, #tpu.memory_space<vmem>>, %arg4: memref<1x64x256xf32, #tpu.memory_space<vmem>>, %arg5: memref<1x64x256xf32, #tpu.memory_space<vmem>>) attributes {dimension_semantics = [#tpu.dimension_semantics<parallel>, #tpu.dimension_semantics<parallel>], iteration_bounds = array<i64: 2, 1>, scalar_prefetch = 0 : i64, scratch_operands = 0 : i64, tpu.core_type = #tpu.core_type<tc>, window_params = [{transform_indices = @transform_0, window_bounds = array<i64: 1, 64, 256>}, {transform_indices = @transform_1, window_bounds = array<i64: 1, 64, 2>}, {transform_indices = @transform_2, window_bounds = array<i64: 1, 64, 256>}, {transform_indices = @transform_3, window_bounds = array<i64: 1, 64, 256>}]} {
    %c0 = arith.constant 0 : index
    %c0_0 = arith.constant 0 : index
    %c0_1 = arith.constant 0 : index
    %0 = vector.load %arg2[%c0, %c0_0, %c0_1] : memref<1x64x256xf32, #tpu.memory_space<vmem>>, vector<1x64x256xf32>
    %c0_2 = arith.constant 0 : index
    %c0_3 = arith.constant 0 : index
    %c0_4 = arith.constant 0 : index
    %1 = vector.load %arg3[%c0_2, %c0_3, %c0_4] : memref<1x64x2xf32, #tpu.memory_space<vmem>>, vector<1x64x2xf32>
    %2 = vector.extract_strided_slice %1 {offsets = [0, 0, 0], sizes = [1, 64, 1], strides = [1, 1, 1]} : vector<1x64x2xf32> to vector<1x64x1xf32>
    %3 = vector.broadcast %2 : vector<1x64x1xf32> to vector<1x64x256xf32>
    %4 = arith.mulf %0, %3 : vector<1x64x256xf32>
    %c0_5 = arith.constant 0 : index
    %c0_6 = arith.constant 0 : index
    %c0_7 = arith.constant 0 : index
    %5 = vector.load %arg4[%c0_5, %c0_6, %c0_7] : memref<1x64x256xf32, #tpu.memory_space<vmem>>, vector<1x64x256xf32>
    tpu.vector_store %arg4[%c0_5, %c0_6, %c0_7], %4 {strides = array<i32>} : memref<1x64x256xf32, #tpu.memory_space<vmem>>, vector<1x64x256xf32>,
    %6 = vector.extract_strided_slice %1 {offsets = [0, 0, 1], sizes = [1, 64, 1], strides = [1, 1, 1]} : vector<1x64x2xf32> to vector<1x64x1xf32>
    %7 = vector.broadcast %6 : vector<1x64x1xf32> to vector<1x64x256xf32>
    %8 = arith.mulf %0, %7 : vector<1x64x256xf32>
    %c0_8 = arith.constant 0 : index
    %c0_9 = arith.constant 0 : index
    %c0_10 = arith.constant 0 : index
    %9 = vector.load %arg5[%c0_8, %c0_9, %c0_10] : memref<1x64x256xf32, #tpu.memory_space<vmem>>, vector<1x64x256xf32>
    tpu.vector_store %arg5[%c0_8, %c0_9, %c0_10], %8 {strides = array<i32>} : memref<1x64x256xf32, #tpu.memory_space<vmem>>, vector<1x64x256xf32>,
    return
  }
  func.func @transform_0(%arg0: i32, %arg1: i32) -> (i32, i32, i32) {
    %c0_i32 = arith.constant 0 : i32
    %c0_i32_0 = arith.constant 0 : i32
    return %arg0, %c0_i32, %arg1 : i32, i32, i32
  }
  func.func @transform_1(%arg0: i32, %arg1: i32) -> (i32, i32, i32) {
    %c0_i32 = arith.constant 0 : i32
    %c0_i32_0 = arith.constant 0 : i32
    %c0_i32_1 = arith.constant 0 : i32
    return %arg0, %c0_i32, %c0_i32_0 : i32, i32, i32
  }
  func.func @transform_2(%arg0: i32, %arg1: i32) -> (i32, i32, i32) {
    %c0_i32 = arith.constant 0 : i32
    %c0_i32_0 = arith.constant 0 : i32
    return %arg0, %c0_i32, %arg1 : i32, i32, i32
  }
  func.func @transform_3(%arg0: i32, %arg1: i32) -> (i32, i32, i32) {
    %c0_i32 = arith.constant 0 : i32
    %c0_i32_0 = arith.constant 0 : i32
    return %arg0, %c0_i32, %arg1 : i32, i32, i32
  }
}

</mosaic_0001>

<llo_original>
// kernel: me_layer_pallas.1
$region0: #{me_layer_pallas.1}
  #allocation0 [shape = 'u32[]', space=smem, size = 0x4, offset = 0x4, fixed_abs, tag = 'smem constant byte address 0x4 - core index']
  #allocation1 [shape = 'u32[144,128]{1,0:T(1,128)}', space=vmem, size = 0x12000, scoped, tag = 'internal scratch']
  %s0 = inlined_call_operand.vmem [shape: f32[2,64,256], index: 0, kind: input, shape index: {}]
  %s1 = inlined_call_operand.vmem [shape: f32[2,64,2], index: 1, kind: input, shape index: {}]
  %s2 = inlined_call_operand.vmem [shape: f32[2,64,256], index: 2, kind: output, shape index: {0}]
  %s3 = inlined_call_operand.vmem [shape: f32[2,64,256], index: 3, kind: output, shape index: {1}]
  %4 = xla_tuple %s2, %s3
  %s5 = sld [smem:[#allocation0]]
  $region49: #{me_layer_pallas.1} parent=0
    _
  %s7 = ssub.s32 1, %s5
  %s8 = scalar_select 0, %s7, %s5
  loop: start=0, step=1, limit=4
  $region2: #{me_layer_pallas.1} parent=0 // loop_pre_header
    _
  $region3: #{me_layer_pallas.1} parent=0 // loop_header
    %s10 = sphi 0, %s14
    %p11 = scmp.ge.s32.totalorder %s10, 4
    %s17 = sphi 0, %s29
    %s18 = sphi 0, %s25
    %s19 = sphi 0, %s17
    %s20 = sphi 0, %s18
    %s21 = sphi 0, %s19
    %s22 = sphi 0, %s20
    %s34 = sphi 0, %s36
    %s37 = sphi 0, %s34
    %s38 = sphi 0, %s37
    %s54 = sphi 0, %s38
    %s60 = sphi 0, %s62
    %s63 = sphi 0, %s60
    %s64 = sphi 0, %s63
    %s80 = sphi 0, %s64
    %s88 = sphi 0, %s90
    %s91 = sphi 0, %s88
    %s92 = sphi 0, %s91
    %s108 = sphi 0, %s92
    %s116 = sphi 0, %s118
    %s119 = sphi 0, %s116
    %s120 = sphi 0, %s119
    %s136 = sphi 0, %s120
  $region4: #{me_layer_pallas.1} parent=0 // loop_header_branch
    %13 = sbr.rel (%p11) target = $region8
  $region5: #{me_layer_pallas.1} parent=0 // loop_body
    %s15 = ssub.s32 %s10, 1
    %s16 = ssub.s32 %s10, 2
    %s23 = sadd.s32 1, %s18
    %p24 = scmp.ge.s32.totalorder %s23, 1
    %s25 = scalar_select %p24, 0, %s23
    %s26 = sadd.s32 1, %s17
    %s27 = scalar_select %p24, %s26, %s17
    %p28 = scmp.ge.s32.totalorder %s27, 2
    %s29 = scalar_select %p28, 0, %s27
    %s30 = ssub.s32 %s17, %s29
    %s31 = ssub.s32 %s18, %s25
    %s32 = sor.u32 %s30, %s31
    %p33 = scmp.eq.s32.totalorder %s32, 0
    %s35 = sadd.s32 %s34, 1
    %s36 = scalar_select %p33, %s34, %s35
    %p39 = pneg %p33
    %p40 = scmp.eq.s32.totalorder %s10, 1
    %p41 = por %p39, %p40
    %p42 = scmp.ne.s32.totalorder %s34, %s37
    %p43 = scmp.eq.s32.totalorder %s10, 0
    %p44 = por %p42, %p43
    %p45 = scmp.ne.s32.totalorder %s34, %s37
    %p46 = scmp.eq.s32.totalorder %s15, 1
    %p47 = por %p45, %p46
    %p48 = scmp.ne.s32.totalorder %s37, %s38
    %p49 = scmp.eq.s32.totalorder %s15, 0
    %p50 = por %p48, %p49
    %p51 = scmp.ne.s32.totalorder %s37, %s38
    %p52 = scmp.eq.s32.totalorder %s16, 1
    %p53 = por %p51, %p52
    %p55 = scmp.ne.s32.totalorder %s38, %s54
    %p56 = scmp.eq.s32.totalorder %s16, 0
    %p57 = por %p55, %p56
    %s58 = ssub.s32 %s17, %s29
    %p59 = scmp.eq.s32.totalorder %s58, 0
    %s61 = sadd.s32 %s60, 1
    %s62 = scalar_select %p59, %s60, %s61
    %p65 = pneg %p59
    %p66 = scmp.eq.s32.totalorder %s10, 1
    %p67 = por %p65, %p66
    %p68 = scmp.ne.s32.totalorder %s60, %s63
    %p69 = scmp.eq.s32.totalorder %s10, 0
    %p70 = por %p68, %p69
    %p71 = scmp.ne.s32.totalorder %s60, %s63
    %p72 = scmp.eq.s32.totalorder %s15, 1
    %p73 = por %p71, %p72
    %p74 = scmp.ne.s32.totalorder %s63, %s64
    %p75 = scmp.eq.s32.totalorder %s15, 0
    %p76 = por %p74, %p75
    %p77 = scmp.ne.s32.totalorder %s63, %s64
    %p78 = scmp.eq.s32.totalorder %s16, 1
    %p79 = por %p77, %p78
    %p81 = scmp.ne.s32.totalorder %s64, %s80
    %p82 = scmp.eq.s32.totalorder %s16, 0
    %p83 = por %p81, %p82
    %s84 = ssub.s32 %s17, %s29
    %s85 = ssub.s32 %s18, %s25
    %s86 = sor.u32 %s84, %s85
    %p87 = scmp.eq.s32.totalorder %s86, 0
    %s89 = sadd.s32 %s88, 1
    %s90 = scalar_select %p87, %s88, %s89
    %p93 = pneg %p87
    %p94 = scmp.eq.s32.totalorder %s10, 1
    %p95 = por %p93, %p94
    %p96 = scmp.ne.s32.totalorder %s88, %s91
    %p97 = scmp.eq.s32.totalorder %s10, 0
    %p98 = por %p96, %p97
    %p99 = scmp.ne.s32.totalorder %s88, %s91
    %p100 = scmp.eq.s32.totalorder %s15, 1
    %p101 = por %p99, %p100
    %p102 = scmp.ne.s32.totalorder %s91, %s92
    %p103 = scmp.eq.s32.totalorder %s15, 0
    %p104 = por %p102, %p103
    %p105 = scmp.ne.s32.totalorder %s91, %s92
    %p106 = scmp.eq.s32.totalorder %s16, 1
    %p107 = por %p105, %p106
    %p109 = scmp.ne.s32.totalorder %s92, %s108
    %p110 = scmp.eq.s32.totalorder %s16, 0
    %p111 = por %p109, %p110
    %s112 = ssub.s32 %s17, %s29
    %s113 = ssub.s32 %s18, %s25
    %s114 = sor.u32 %s112, %s113
    %p115 = scmp.eq.s32.totalorder %s114, 0
    %s117 = sadd.s32 %s116, 1
    %s118 = scalar_select %p115, %s116, %s117
    %p121 = pneg %p115
    %p122 = scmp.eq.s32.totalorder %s10, 1
    %p123 = por %p121, %p122
    %p124 = scmp.ne.s32.totalorder %s116, %s119
    %p125 = scmp.eq.s32.totalorder %s10, 0
    %p126 = por %p124, %p125
    %p127 = scmp.ne.s32.totalorder %s116, %s119
    %p128 = scmp.eq.s32.totalorder %s15, 1
    %p129 = por %p127, %p128
    %p130 = scmp.ne.s32.totalorder %s119, %s120
    %p131 = scmp.eq.s32.totalorder %s15, 0
    %p132 = por %p130, %p131
    %p133 = scmp.ne.s32.totalorder %s119, %s120
    %p134 = scmp.eq.s32.totalorder %s16, 1
    %p135 = por %p133, %p134
    %p137 = scmp.ne.s32.totalorder %s120, %s136
    %p138 = scmp.eq.s32.totalorder %s16, 0
    %p139 = por %p137, %p138
    %p140 = scmp.le.s32.totalorder 1, %s10
    %p141 = scmp.lt.s32.totalorder %s10, 3
    %p142 = pnand %p140, %p141
    %p143 = pneg %p142
    // Predicated region
    $region9: #{me_layer_pallas.1} parent=5 // pred_check
      _
    $region10: #{me_layer_pallas.1} parent=5 // pred_check_branch
      %145 = sbr.rel (%p142) target = $region12
    $region11: #{me_layer_pallas.1} parent=5 // pred_region
      %s146 = ssub.s32 %s10, 1
    $region12: #{me_layer_pallas.1} parent=5 // pred_fallthru
      _
    %p147 = scmp.lt.s32.totalorder %s10, 2
    // Predicated region
    $region13: #{me_layer_pallas.1} parent=5 // pred_check
      %p148 = pneg %p147
    $region14: #{me_layer_pallas.1} parent=5 // pred_check_branch
      %150 = sbr.rel (%p148) target = $region16
    $region15: #{me_layer_pallas.1} parent=5 // pred_region
      // Predicated region
      $region17: #{me_layer_pallas.1} parent=15 // pred_check
        %p151 = pneg %p44
      $region18: #{me_layer_pallas.1} parent=15 // pred_check_branch
        %153 = sbr.rel (%p151) target = $region20
      $region19: #{me_layer_pallas.1} parent=15 // pred_region
        %s154 = smul.u32 2, %s18
        %p155 = scmp.lt.s32.totalorder %s17, 1
        %s156 = scalar_select %p155, %s17, 1
        %p157 = scmp.lt.s32.totalorder %s154, 1
        %s158 = scalar_select %p157, %s154, 1
        %s159 = smul.addr %s156, 16
        %s160 = sadd.s32 %s158, %s159
        %s161 = smul.addr %s160, 8
        %s162 = scalar_lea.vmem %s0, %s161
        %s163 = smul.u32 2, %s18
      $region20: #{me_layer_pallas.1} parent=15 // pred_fallthru
        _
      // Predicated region
      $region21: #{me_layer_pallas.1} parent=15 // pred_check
        %p164 = pneg %p70
      $region22: #{me_layer_pallas.1} parent=15 // pred_check_branch
        %166 = sbr.rel (%p164) target = $region24
      $region23: #{me_layer_pallas.1} parent=15 // pred_region
        %p167 = scmp.lt.s32.totalorder %s17, 1
        %s168 = scalar_select %p167, %s17, 1
        %s169 = smul.addr %s168, 8
        %s170 = smul.addr %s169, 8
        %s171 = scalar_lea.vmem %s1, %s170
      $region24: #{me_layer_pallas.1} parent=15 // pred_fallthru
        _
    $region16: #{me_layer_pallas.1} parent=5 // pred_fallthru
      _
    %p172 = scmp.le.s32.totalorder 1, %s10
    %p173 = scmp.lt.s32.totalorder %s10, 3
    %p174 = pnand %p172, %p173
    %p175 = pneg %p174
    // Predicated region
    $region25: #{me_layer_pallas.1} parent=5 // pred_check
      _
    $region26: #{me_layer_pallas.1} parent=5 // pred_check_branch
      %177 = sbr.rel (%p174) target = $region28
    $region27: #{me_layer_pallas.1} parent=5 // pred_region
      %s178 = ssub.s32 %s10, 1
      %s179 = smul.u32 2, %s20
      %p180 = scmp.lt.s32.totalorder %s19, 1
      %s181 = scalar_select %p180, %s19, 1
      %p182 = scmp.lt.s32.totalorder %s179, 1
      %s183 = scalar_select %p182, %s179, 1
      %s184 = smul.addr %s181, 16
      %s185 = sadd.s32 %s183, %s184
      %s186 = smul.addr %s185, 8
      %s187 = scalar_lea.vmem %s0, %s186
      %p188 = pneg %p50
      %p189 = pneg %p47
      %p190 = scmp.lt.s32.totalorder %s19, 1
      %s191 = scalar_select %p190, %s19, 1
      %s192 = smul.addr %s191, 8
      %s193 = smul.addr %s192, 8
      %s194 = scalar_lea.vmem %s1, %s193
      %p195 = pneg %p76
      %p196 = pneg %p73
      %p197 = pneg %p104
      %p198 = pneg %p101
      %s199 = smul.u32 2, %s20
      %p200 = scmp.lt.s32.totalorder %s19, 1
      %s201 = scalar_select %p200, %s19, 1
      %p202 = scmp.lt.s32.totalorder %s199, 1
      %s203 = scalar_select %p202, %s199, 1
      %s204 = smul.addr %s201, 16
      %s205 = sadd.s32 %s203, %s204
      %s206 = smul.addr %s205, 8
      %s207 = scalar_lea.vmem %s2, %s206
      %p208 = pneg %p132
      %p209 = pneg %p129
      %s210 = smul.u32 2, %s20
      %p211 = scmp.lt.s32.totalorder %s19, 1
      %s212 = scalar_select %p211, %s19, 1
      %p213 = scmp.lt.s32.totalorder %s210, 1
      %s214 = scalar_select %p213, %s210, 1
      %s215 = smul.addr %s212, 16
      %s216 = sadd.s32 %s214, %s215
      %s217 = smul.addr %s216, 8
      %s218 = scalar_lea.vmem %s3, %s217
      %s219 = smul.u32 2, %s20
      %p220 = scmp.lt.s32.totalorder %s19, 1
      %s221 = scalar_select %p220, %s19, 1
      %p222 = scmp.lt.s32.totalorder %s219, 1
      %s223 = scalar_select %p222, %s219, 1
      %s224 = smul.addr %s221, 16
      %s225 = sadd.s32 %s223, %s224
      %s226 = smul.addr %s225, 8
      %s227 = scalar_lea.vmem %s0, %s226
      %s228 = smul.u32 2, %s20
      %p229 = scmp.lt.s32.totalorder %s19, 1
      %s230 = scalar_select %p229, %s19, 1
      %s231 = smul.addr %s230, 8
      %s232 = smul.addr %s231, 8
      %s233 = scalar_lea.vmem %s1, %s232
      %s234 = smul.u32 2, %s20
      %p235 = scmp.lt.s32.totalorder %s19, 1
      %s236 = scalar_select %p235, %s19, 1
      %p237 = scmp.lt.s32.totalorder %s234, 1
      %s238 = scalar_select %p237, %s234, 1
      %s239 = smul.addr %s236, 16
      %s240 = sadd.s32 %s238, %s239
      %s241 = smul.addr %s240, 8
      %s242 = scalar_lea.vmem %s2, %s241
      %s243 = smul.u32 2, %s20
      %s244 = smul.u32 2, %s20
      %p245 = scmp.lt.s32.totalorder %s19, 1
      %s246 = scalar_select %p245, %s19, 1
      %p247 = scmp.lt.s32.totalorder %s244, 1
      %s248 = scalar_select %p247, %s244, 1
      %s249 = smul.addr %s246, 16
      %s250 = sadd.s32 %s248, %s249
      %s251 = smul.addr %s250, 8
      %s252 = scalar_lea.vmem %s3, %s251
      %s253 = smul.u32 2, %s20
      %v254 = vld [vmem:[%s227] sm:$0xff]
      %v255 = vld [vmem:[%s227 + $0x8] sm:$0xff]
      %v256 = vld [vmem:[%s227 + $0x10] sm:$0xff]
      %v257 = vld [vmem:[%s227 + $0x18] sm:$0xff]
      %v258 = vld [vmem:[%s227 + $0x20] sm:$0xff]
      %v259 = vld [vmem:[%s227 + $0x28] sm:$0xff]
      %v260 = vld [vmem:[%s227 + $0x30] sm:$0xff]
      %v261 = vld [vmem:[%s227 + $0x38] sm:$0xff]
      %v262 = vld [vmem:[%s227 + $0x40] sm:$0xff]
      %v263 = vld [vmem:[%s227 + $0x48] sm:$0xff]
      %v264 = vld [vmem:[%s227 + $0x50] sm:$0xff]
      %v265 = vld [vmem:[%s227 + $0x58] sm:$0xff]
      %v266 = vld [vmem:[%s227 + $0x60] sm:$0xff]
      %v267 = vld [vmem:[%s227 + $0x68] sm:$0xff]
      %v268 = vld [vmem:[%s227 + $0x70] sm:$0xff]
      %v269 = vld [vmem:[%s227 + $0x78] sm:$0xff]
      %v270 = vld [vmem:[%s233] sm:$0xff]
      %v271 = vld [vmem:[%s233 + $0x8] sm:$0xff]
      %v272 = vld [vmem:[%s233 + $0x10] sm:$0xff]
      %v273 = vld [vmem:[%s233 + $0x18] sm:$0xff]
      %v274 = vld [vmem:[%s233 + $0x20] sm:$0xff]
      %v275 = vld [vmem:[%s233 + $0x28] sm:$0xff]
      %v276 = vld [vmem:[%s233 + $0x30] sm:$0xff]
      %v277 = vld [vmem:[%s233 + $0x38] sm:$0xff]
      %279 = vset.pattern.permute.xlu0 0
      %280 = vperm.xlu0 %279, %v270
      %v281 = vpop.permute.xlu0 %280
      %284 = vset.pattern.permute.xlu0 0
      %285 = vperm.xlu0 %284, %v271
      %v286 = vpop.permute.xlu0 %285
      %289 = vset.pattern.permute.xlu0 0
      %290 = vperm.xlu0 %289, %v272
      %v291 = vpop.permute.xlu0 %290
      %294 = vset.pattern.permute.xlu0 0
      %295 = vperm.xlu0 %294, %v273
      %v296 = vpop.permute.xlu0 %295
      %299 = vset.pattern.permute.xlu0 0
      %300 = vperm.xlu0 %299, %v274
      %v301 = vpop.permute.xlu0 %300
      %304 = vset.pattern.permute.xlu0 0
      %305 = vperm.xlu0 %304, %v275
      %v306 = vpop.permute.xlu0 %305
      %309 = vset.pattern.permute.xlu0 0
      %310 = vperm.xlu0 %309, %v276
      %v311 = vpop.permute.xlu0 %310
      %314 = vset.pattern.permute.xlu0 0
      %315 = vperm.xlu0 %314, %v277
      %v316 = vpop.permute.xlu0 %315
      %v318 = vmul.f32 %v254, %v281
      %v319 = vmul.f32 %v255, %v281
      %v320 = vmul.f32 %v256, %v286
      %v321 = vmul.f32 %v257, %v286
      %v322 = vmul.f32 %v258, %v291
      %v323 = vmul.f32 %v259, %v291
      %v324 = vmul.f32 %v260, %v296
      %v325 = vmul.f32 %v261, %v296
      %v326 = vmul.f32 %v262, %v301
      %v327 = vmul.f32 %v263, %v301
      %v328 = vmul.f32 %v264, %v306
      %v329 = vmul.f32 %v265, %v306
      %v330 = vmul.f32 %v266, %v311
      %v331 = vmul.f32 %v267, %v311
      %v332 = vmul.f32 %v268, %v316
      %v333 = vmul.f32 %v269, %v316
      %334 = vst [vmem:[%s242] sm:$0xff] %v318
      %335 = vst [vmem:[%s242 + $0x8] sm:$0xff] %v319
      %336 = vst [vmem:[%s242 + $0x10] sm:$0xff] %v320
      %337 = vst [vmem:[%s242 + $0x18] sm:$0xff] %v321
      %338 = vst [vmem:[%s242 + $0x20] sm:$0xff] %v322
      %339 = vst [vmem:[%s242 + $0x28] sm:$0xff] %v323
      %340 = vst [vmem:[%s242 + $0x30] sm:$0xff] %v324
      %341 = vst [vmem:[%s242 + $0x38] sm:$0xff] %v325
      %342 = vst [vmem:[%s242 + $0x40] sm:$0xff] %v326
      %343 = vst [vmem:[%s242 + $0x48] sm:$0xff] %v327
      %344 = vst [vmem:[%s242 + $0x50] sm:$0xff] %v328
      %345 = vst [vmem:[%s242 + $0x58] sm:$0xff] %v329
      %346 = vst [vmem:[%s242 + $0x60] sm:$0xff] %v330
      %347 = vst [vmem:[%s242 + $0x68] sm:$0xff] %v331
      %348 = vst [vmem:[%s242 + $0x70] sm:$0xff] %v332
      %349 = vst [vmem:[%s242 + $0x78] sm:$0xff] %v333
      %350 = vset.pattern.permute.xlu0 1
      %351 = vperm.xlu0 %350, %v270
      %v352 = vpop.permute.xlu0 %351
      %354 = vset.pattern.permute.xlu0 1
      %355 = vperm.xlu0 %354, %v271
      %v356 = vpop.permute.xlu0 %355
      %358 = vset.pattern.permute.xlu0 1
      %359 = vperm.xlu0 %358, %v272
      %v360 = vpop.permute.xlu0 %359
      %362 = vset.pattern.permute.xlu0 1
      %363 = vperm.xlu0 %362, %v273
      %v364 = vpop.permute.xlu0 %363
      %366 = vset.pattern.permute.xlu0 1
      %367 = vperm.xlu0 %366, %v274
      %v368 = vpop.permute.xlu0 %367
      %370 = vset.pattern.permute.xlu0 1
      %371 = vperm.xlu0 %370, %v275
      %v372 = vpop.permute.xlu0 %371
      %374 = vset.pattern.permute.xlu0 1
      %375 = vperm.xlu0 %374, %v276
      %v376 = vpop.permute.xlu0 %375
      %378 = vset.pattern.permute.xlu0 1
      %379 = vperm.xlu0 %378, %v277
      %v380 = vpop.permute.xlu0 %379
      %v382 = vmul.f32 %v254, %v352
      %v383 = vmul.f32 %v255, %v352
      %v384 = vmul.f32 %v256, %v356
      %v385 = vmul.f32 %v257, %v356
      %v386 = vmul.f32 %v258, %v360
      %v387 = vmul.f32 %v259, %v360
      %v388 = vmul.f32 %v260, %v364
      %v389 = vmul.f32 %v261, %v364
      %v390 = vmul.f32 %v262, %v368
      %v391 = vmul.f32 %v263, %v368
      %v392 = vmul.f32 %v264, %v372
      %v393 = vmul.f32 %v265, %v372
      %v394 = vmul.f32 %v266, %v376
      %v395 = vmul.f32 %v267, %v376
      %v396 = vmul.f32 %v268, %v380
      %v397 = vmul.f32 %v269, %v380
      %398 = vst [vmem:[%s252] sm:$0xff] %v382
      %399 = vst [vmem:[%s252 + $0x8] sm:$0xff] %v383
      %400 = vst [vmem:[%s252 + $0x10] sm:$0xff] %v384
      %401 = vst [vmem:[%s252 + $0x18] sm:$0xff] %v385
      %402 = vst [vmem:[%s252 + $0x20] sm:$0xff] %v386
      %403 = vst [vmem:[%s252 + $0x28] sm:$0xff] %v387
      %404 = vst [vmem:[%s252 + $0x30] sm:$0xff] %v388
      %405 = vst [vmem:[%s252 + $0x38] sm:$0xff] %v389
      %406 = vst [vmem:[%s252 + $0x40] sm:$0xff] %v390
      %407 = vst [vmem:[%s252 + $0x48] sm:$0xff] %v391
      %408 = vst [vmem:[%s252 + $0x50] sm:$0xff] %v392
      %409 = vst [vmem:[%s252 + $0x58] sm:$0xff] %v393
      %410 = vst [vmem:[%s252 + $0x60] sm:$0xff] %v394
      %411 = vst [vmem:[%s252 + $0x68] sm:$0xff] %v395
      %412 = vst [vmem:[%s252 + $0x70] sm:$0xff] %v396
      %413 = vst [vmem:[%s252 + $0x78] sm:$0xff] %v397
      %s414 = smul.u32 2, %s20
      %p415 = scmp.lt.s32.totalorder %s19, 1
      %s416 = scalar_select %p415, %s19, 1
      %p417 = scmp.lt.s32.totalorder %s414, 1
      %s418 = scalar_select %p417, %s414, 1
      %s419 = smul.addr %s416, 16
      %s420 = sadd.s32 %s418, %s419
      %s421 = smul.addr %s420, 8
      %s422 = scalar_lea.vmem %s2, %s421
      %s423 = smul.u32 2, %s20
      %p424 = scmp.lt.s32.totalorder %s19, 1
      %s425 = scalar_select %p424, %s19, 1
      %p426 = scmp.lt.s32.totalorder %s423, 1
      %s427 = scalar_select %p426, %s423, 1
      %s428 = smul.addr %s425, 16
      %s429 = sadd.s32 %s427, %s428
      %s430 = smul.addr %s429, 8
      %s431 = scalar_lea.vmem %s3, %s430
      // Predicated region
      $region29: #{me_layer_pallas.1} parent=27 // pred_check
        %p432 = pneg %p101
      $region30: #{me_layer_pallas.1} parent=27 // pred_check_branch
        %434 = sbr.rel (%p432) target = $region32
      $region31: #{me_layer_pallas.1} parent=27 // pred_region
        %s435 = smul.u32 2, %s20
      $region32: #{me_layer_pallas.1} parent=27 // pred_fallthru
        _
      // Predicated region
      $region33: #{me_layer_pallas.1} parent=27 // pred_check
        %p436 = pneg %p129
      $region34: #{me_layer_pallas.1} parent=27 // pred_check_branch
        %438 = sbr.rel (%p436) target = $region36
      $region35: #{me_layer_pallas.1} parent=27 // pred_region
        %s439 = smul.u32 2, %s20
      $region36: #{me_layer_pallas.1} parent=27 // pred_fallthru
        _
    $region28: #{me_layer_pallas.1} parent=5 // pred_fallthru
      _
    %p440 = scmp.le.s32.totalorder 2, %s10
    // Predicated region
    $region37: #{me_layer_pallas.1} parent=5 // pred_check
      %p441 = pneg %p440
    $region38: #{me_layer_pallas.1} parent=5 // pred_check_branch
      %443 = sbr.rel (%p441) target = $region40
    $region39: #{me_layer_pallas.1} parent=5 // pred_region
      %s444 = ssub.s32 %s10, 2
      // Predicated region
      $region41: #{me_layer_pallas.1} parent=39 // pred_check
        %p445 = pneg %p107
      $region42: #{me_layer_pallas.1} parent=39 // pred_check_branch
        %447 = sbr.rel (%p445) target = $region44
      $region43: #{me_layer_pallas.1} parent=39 // pred_region
        %s448 = smul.u32 2, %s22
        %p449 = scmp.lt.s32.totalorder %s21, 1
        %s450 = scalar_select %p449, %s21, 1
        %p451 = scmp.lt.s32.totalorder %s448, 1
        %s452 = scalar_select %p451, %s448, 1
        %s453 = smul.addr %s450, 16
        %s454 = sadd.s32 %s452, %s453
        %s455 = smul.addr %s454, 8
        %s456 = scalar_lea.vmem %s2, %s455
      $region44: #{me_layer_pallas.1} parent=39 // pred_fallthru
        _
      // Predicated region
      $region45: #{me_layer_pallas.1} parent=39 // pred_check
        %p457 = pneg %p135
      $region46: #{me_layer_pallas.1} parent=39 // pred_check_branch
        %459 = sbr.rel (%p457) target = $region48
      $region47: #{me_layer_pallas.1} parent=39 // pred_region
        %s460 = smul.u32 2, %s22
        %p461 = scmp.lt.s32.totalorder %s21, 1
        %s462 = scalar_select %p461, %s21, 1
        %p463 = scmp.lt.s32.totalorder %s460, 1
        %s464 = scalar_select %p463, %s460, 1
        %s465 = smul.addr %s462, 16
        %s466 = sadd.s32 %s464, %s465
        %s467 = smul.addr %s466, 8
        %s468 = scalar_lea.vmem %s3, %s467
      $region48: #{me_layer_pallas.1} parent=39 // pred_fallthru
        _
    $region40: #{me_layer_pallas.1} parent=5 // pred_fallthru
      _
  $region6: #{me_layer_pallas.1} parent=0 // loop_footer
    %s14 = sadd.s32 1, %s10
  $region7: #{me_layer_pallas.1} parent=0 // loop_footer_branch
    %9 = sbr.rel target = $region3
  $region8: #{me_layer_pallas.1} parent=0 // loop_exit
    _

</llo_original>
